<compile_context>
chip_gen: v6e
topology: v6e:2x2x1
jax: 0.10.0
libtpu: 0.0.40
codegen_flags: <defaults>
</compile_context>

<pallas_src>
import functools

import jax
import jax.numpy as jnp
from jax import lax
from jax.experimental import pallas as pl
from jax.experimental.pallas import tpu as pltpu


def _round_up(x, m):
    return ((x + m - 1) // m) * m


def _focal_loss_kernel(logits_ref, targets_ref, *rest, gamma, n_valid,
                       block_n, tiles_per_chunk, has_alpha):
    if has_alpha:
        alpha_ref, out_ref, acc_ref = rest
    else:
        out_ref, acc_ref = rest

    c = pl.program_id(0)          # chunk (parallel axis)
    i = pl.program_id(1)          # batch tile within chunk (reduction axis)

    @pl.when(i == 0)
    def _():
        acc_ref[...] = jnp.zeros_like(acc_ref)

    x = logits_ref[...].astype(jnp.float32)       # (C, TN)  lane-dense
    t = targets_ref[...]                          # (1, TN)  int32

    # numerically-stable log-sum-exp over the class (sublane) axis
    m = jnp.max(x, axis=0, keepdims=True)                               # (1, TN)
    lse = jnp.log(jnp.sum(jnp.exp(x - m), axis=0, keepdims=True)) + m   # (1, TN)

    # target-class logit via one-hot along the class axis
    classes = lax.broadcasted_iota(jnp.int32, x.shape, 0)               # (C, TN)
    onehot = classes == t                                               # (C, TN) bool
    tgt_logit = jnp.sum(jnp.where(onehot, x, 0.0), axis=0, keepdims=True)

    # cross-entropy (reduction='none'), optionally weighted per class (alpha)
    ce = lse - tgt_logit                                                # (1, TN)
    if has_alpha:
        a = alpha_ref[...].astype(jnp.float32)                          # (C, 1)
        w = jnp.sum(jnp.where(onehot, a, 0.0), axis=0, keepdims=True)
        ce = w * ce

    # focal modulation: (1 - pt)^gamma * ce, pt = exp(-ce)
    pt = jnp.exp(-ce)
    focal = (1.0 - pt) ** gamma * ce       # integer gamma -> integer_pow (VPU)

    # mask batch-padding columns (tail of last tile / chunk padding)
    col = (c * tiles_per_chunk + i) * block_n + lax.broadcasted_iota(
        jnp.int32, focal.shape, 1)
    focal = jnp.where(col < n_valid, focal, 0.0)

    acc_ref[...] += focal                  # vector accumulate, no per-step reduce

    @pl.when(i == pl.num_programs(1) - 1)
    def _():
        out_ref[...] = jnp.sum(acc_ref[...]).reshape(1, 1, 1)   # one tree-reduce/chunk


def focal_loss(logits, targets, alpha=None, gamma=2, reduction='mean', *,
               block_n=2048, num_chunks=2):
    """Focal loss matching the PyTorch FocalLoss module (2-D cross_entropy case).

    logits: (N, C) float (f32 or bf16 — math is always f32 in-kernel),
    targets: (N,) integer class ids, alpha: optional (C,) class weights.
    """
    N, C = logits.shape

    # Effective lane tile: multiple of 128, at most block_n, no wider than needed.
    bn = min(block_n, _round_up(N, 128))
    tiles = pl.cdiv(N, bn)
    chunks = max(1, min(num_chunks, tiles))      # >1 only helps v7x (2 TCs/chip)
    tiles_per_chunk = pl.cdiv(tiles, chunks)
    n_pad = chunks * tiles_per_chunk * bn

    # Lane-dense layout: classes on sublanes, batch on lanes.
    logits_t = jnp.pad(jnp.transpose(logits), ((0, 0), (0, n_pad - N)))
    targets_row = jnp.pad(jnp.reshape(targets.astype(jnp.int32), (1, N)),
                          ((0, 0), (0, n_pad - N)))

    has_alpha = alpha is not None
    in_specs = [
        pl.BlockSpec((C, bn), lambda c, i: (0, c * tiles_per_chunk + i)),  # logits
        pl.BlockSpec((1, bn), lambda c, i: (0, c * tiles_per_chunk + i)),  # targets
    ]
    args = [logits_t, targets_row]
    if has_alpha:
        in_specs.append(pl.BlockSpec((C, 1), lambda c, i: (0, 0)))         # alpha (resident)
        args.append(jnp.asarray(alpha, jnp.float32).reshape(C, 1))

    gamma_static = int(gamma) if float(gamma).is_integer() else float(gamma)
    kernel = functools.partial(
        _focal_loss_kernel, gamma=gamma_static, n_valid=N, block_n=bn,
        tiles_per_chunk=tiles_per_chunk, has_alpha=has_alpha)

    partial_sums = pl.pallas_call(
        kernel,
        out_shape=jax.ShapeDtypeStruct((chunks, 1, 1), jnp.float32),
        grid_spec=pltpu.PrefetchScalarGridSpec(
            num_scalar_prefetch=0,
            grid=(chunks, tiles_per_chunk),
            in_specs=in_specs,
            out_specs=pl.BlockSpec((1, 1, 1), lambda c, i: (c, 0, 0)),
            scratch_shapes=[pltpu.VMEM((1, bn), jnp.float32)],
        ),
        compiler_params=pltpu.CompilerParams(
            dimension_semantics=("parallel", "arbitrary"),
        ),
    )(*args)

    total = jnp.sum(partial_sums)
    if reduction == 'mean':
        return total / jnp.float32(N)
    elif reduction == 'sum':
        return total
    else:
        # TODO(synk): reduction='none' needs a per-row output spec; not wired up here.
        raise NotImplementedError("reduction='none' is not supported by this kernel")


def _focal_loss_ref(logits, targets, alpha=None, gamma=2):
    # pure-JAX reference replicating F.cross_entropy(reduction='none') + focal
    logp = jax.nn.log_softmax(logits.astype(jnp.float32), axis=-1)
    nll = -jnp.take_along_axis(logp, targets[:, None], axis=-1)[:, 0]
    if alpha is not None:
        nll = nll * alpha[targets]
    pt = jnp.exp(-nll)
    return jnp.mean((1.0 - pt) ** gamma * nll)


if __name__ == "__main__":
    key = jax.random.PRNGKey(0)
    k1, k2, k3 = jax.random.split(key, 3)

    N, C = 100, 10            # deliberately not a multiple of 128 (exercises masking)
    logits = jax.random.normal(k1, (N, C), dtype=jnp.float32)
    targets = jax.random.randint(k2, (N,), 0, C, dtype=jnp.int32)
    alpha = jax.random.uniform(k3, (C,), dtype=jnp.float32, minval=0.5, maxval=1.5)

    # default FocalLoss(): alpha=None, gamma=2, reduction='mean'
    loss = jax.block_until_ready(focal_loss(logits, targets, alpha=None, gamma=2))
    ref = _focal_loss_ref(logits, targets, alpha=None, gamma=2)
    assert jnp.allclose(loss, ref, rtol=1e-5, atol=1e-6), (loss, ref)

    # with per-class weights (alpha) as well
    loss_a = jax.block_until_ready(focal_loss(logits, targets, alpha=alpha, gamma=2))
    ref_a = _focal_loss_ref(logits, targets, alpha=alpha, gamma=2)
    assert jnp.allclose(loss_a, ref_a, rtol=1e-5, atol=1e-6), (loss_a, ref_a)

    print("KERNEL_OK")
</pallas_src>

<mosaic_0001>
module attributes {stable_mosaic.version = 11 : i64} {
  func.func @_focal_loss_kernel(%arg0: i32, %arg1: i32, %arg2: memref<10x128xf32, #tpu.memory_space<vmem>>, %arg3: memref<1x128xi32, #tpu.memory_space<vmem>>, %arg4: memref<1x1x1xf32, #tpu.memory_space<vmem>>, %arg5: memref<1x128xf32, #tpu.memory_space<vmem>>) attributes {dimension_semantics = [#tpu.dimension_semantics<parallel>, #tpu.dimension_semantics<arbitrary>], iteration_bounds = array<i64: 1, 1>, scalar_prefetch = 0 : i64, scratch_operands = 1 : i64, tpu.core_type = #tpu.core_type<tc>, window_params = [{transform_indices = @transform_0, window_bounds = array<i64: 10, 128>}, {transform_indices = @transform_1, window_bounds = array<i64: 1, 128>}, {transform_indices = @transform_2, window_bounds = array<i64: 1, 1, 1>}]} {
    %c0_i32 = arith.constant 0 : i32
    %0 = arith.cmpi eq, %arg1, %c0_i32 : i32
    %1 = arith.extui %0 : i1 to i32
    %c0_i32_0 = arith.constant 0 : i32
    %2 = arith.cmpi ne, %1, %c0_i32_0 : i32
    scf.if %2 {
      %cst_16 = arith.constant 0.000000e+00 : f32
      %45 = vector.broadcast %cst_16 : f32 to vector<1x128xf32>
      %c0_17 = arith.constant 0 : index
      %c0_18 = arith.constant 0 : index
      %46 = vector.load %arg5[%c0_17, %c0_18] : memref<1x128xf32, #tpu.memory_space<vmem>>, vector<1x128xf32>
      tpu.vector_store %arg5[%c0_17, %c0_18], %45 {strides = array<i32>} : memref<1x128xf32, #tpu.memory_space<vmem>>, vector<1x128xf32>,
    } else {
    }
    %c0 = arith.constant 0 : index
    %c0_1 = arith.constant 0 : index
    %3 = vector.load %arg2[%c0, %c0_1] : memref<10x128xf32, #tpu.memory_space<vmem>>, vector<10x128xf32>
    %c0_2 = arith.constant 0 : index
    %c0_3 = arith.constant 0 : index
    %4 = vector.load %arg3[%c0_2, %c0_3] : memref<1x128xi32, #tpu.memory_space<vmem>>, vector<1x128xi32>
    %cst = arith.constant dense<0xFF800000> : vector<128xf32>
    %5 = vector.multi_reduction <maximumf>, %3, %cst [0] : vector<10x128xf32> to vector<128xf32>
    %6 = vector.shape_cast %5 : vector<128xf32> to vector<1x128xf32>
    %7 = vector.broadcast %6 : vector<1x128xf32> to vector<10x128xf32>
    %8 = arith.subf %3, %7 : vector<10x128xf32>
    %9 = math.exp %8 : vector<10x128xf32>
    %cst_4 = arith.constant dense<0.000000e+00> : vector<128xf32>
    %10 = vector.multi_reduction <add>, %9, %cst_4 [0] : vector<10x128xf32> to vector<128xf32>
    %11 = vector.shape_cast %10 : vector<128xf32> to vector<1x128xf32>
    %12 = math.log %11 : vector<1x128xf32>
    %13 = arith.addf %12, %6 : vector<1x128xf32>
    %14 = tpu.iota {dimensions = array<i32: 0>} : vector<10x128xi32>
    %15 = vector.broadcast %4 : vector<1x128xi32> to vector<10x128xi32>
    %16 = arith.cmpi eq, %14, %15 : vector<10x128xi32>
    %cst_5 = arith.constant 0.000000e+00 : f32
    %17 = vector.broadcast %cst_5 : f32 to vector<10x128xf32>
    %18 = arith.select %16, %3, %17 : vector<10x128xi1>, vector<10x128xf32>
    %cst_6 = arith.constant dense<0.000000e+00> : vector<128xf32>
    %19 = vector.multi_reduction <add>, %18, %cst_6 [0] : vector<10x128xf32> to vector<128xf32>
    %20 = vector.shape_cast %19 : vector<128xf32> to vector<1x128xf32>
    %21 = arith.subf %13, %20 : vector<1x128xf32>
    %cst_7 = arith.constant 0.000000e+00 : f32
    %22 = vector.broadcast %cst_7 : f32 to vector<1x128xf32>
    %23 = arith.subf %22, %21 : vector<1x128xf32>
    %24 = math.exp %23 : vector<1x128xf32>
    %cst_8 = arith.constant 1.000000e+00 : f32
    %25 = vector.broadcast %cst_8 : f32 to vector<1x128xf32>
    %26 = arith.subf %25, %24 : vector<1x128xf32>
    %27 = arith.mulf %26, %26 : vector<1x128xf32>
    %28 = arith.mulf %27, %21 : vector<1x128xf32>
    %c1_i32 = arith.constant 1 : i32
    %29 = arith.muli %arg0, %c1_i32 : i32
    %30 = arith.addi %29, %arg1 : i32
    %c128_i32 = arith.constant 128 : i32
    %31 = arith.muli %30, %c128_i32 : i32
    %32 = tpu.iota {dimensions = array<i32: 1>} : vector<1x128xi32>
    %33 = vector.broadcast %31 : i32 to vector<1x128xi32>
    %34 = arith.addi %33, %32 : vector<1x128xi32>
    %c100_i32 = arith.constant 100 : i32
    %35 = vector.broadcast %c100_i32 : i32 to vector<1x128xi32>
    %36 = arith.cmpi slt, %34, %35 : vector<1x128xi32>
    %cst_9 = arith.constant 0.000000e+00 : f32
    %37 = vector.broadcast %cst_9 : f32 to vector<1x128xf32>
    %38 = arith.select %36, %28, %37 : vector<1x128xi1>, vector<1x128xf32>
    %c0_10 = arith.constant 0 : index
    %c0_11 = arith.constant 0 : index
    %39 = vector.load %arg5[%c0_10, %c0_11] : memref<1x128xf32, #tpu.memory_space<vmem>>, vector<1x128xf32>
    %40 = arith.addf %39, %38 : vector<1x128xf32>
    %c0_12 = arith.constant 0 : index
    %c0_13 = arith.constant 0 : index
    %41 = vector.load %arg5[%c0_12, %c0_13] : memref<1x128xf32, #tpu.memory_space<vmem>>, vector<1x128xf32>
    tpu.vector_store %arg5[%c0_12, %c0_13], %40 {strides = array<i32>} : memref<1x128xf32, #tpu.memory_space<vmem>>, vector<1x128xf32>,
    %c0_i32_14 = arith.constant 0 : i32
    %42 = arith.cmpi eq, %arg1, %c0_i32_14 : i32
    %43 = arith.extui %42 : i1 to i32
    %c0_i32_15 = arith.constant 0 : i32
    %44 = arith.cmpi ne, %43, %c0_i32_15 : i32
    scf.if %44 {
      %c0_16 = arith.constant 0 : index
      %c0_17 = arith.constant 0 : index
      %45 = vector.load %arg5[%c0_16, %c0_17] : memref<1x128xf32, #tpu.memory_space<vmem>>, vector<1x128xf32>
      %46 = vector.shape_cast %45 : vector<1x128xf32> to vector<1x1x128xf32>
      %cst_18 = arith.constant dense<0.000000e+00> : vector<1xf32>
      %47 = vector.multi_reduction <add>, %46, %cst_18 [1, 2] : vector<1x1x128xf32> to vector<1xf32>
      %48 = vector.shape_cast %47 : vector<1xf32> to vector<1x1x1xf32>
      %49 = vector.extract %48[0, 0, 0] : f32 from vector<1x1x1xf32>
      %50 = vector.broadcast %49 : f32 to vector<1x1x1xf32>
      %c0_19 = arith.constant 0 : index
      %c0_20 = arith.constant 0 : index
      %c0_21 = arith.constant 0 : index
      %51 = vector.load %arg4[%c0_19, %c0_20, %c0_21] : memref<1x1x1xf32, #tpu.memory_space<vmem>>, vector<1x1x1xf32>
      tpu.vector_store %arg4[%c0_19, %c0_20, %c0_21], %50 {strides = array<i32>} : memref<1x1x1xf32, #tpu.memory_space<vmem>>, vector<1x1x1xf32>,
    } else {
    }
    return
  }
  func.func @transform_0(%arg0: i32, %arg1: i32) -> (i32, i32) {
    %c1_i32 = arith.constant 1 : i32
    %0 = arith.muli %arg0, %c1_i32 : i32
    %1 = arith.addi %0, %arg1 : i32
    %c0_i32 = arith.constant 0 : i32
    %c0_i32_0 = arith.constant 0 : i32
    return %c0_i32, %1 : i32, i32
  }
  func.func @transform_1(%arg0: i32, %arg1: i32) -> (i32, i32) {
    %c1_i32 = arith.constant 1 : i32
    %0 = arith.muli %arg0, %c1_i32 : i32
    %1 = arith.addi %0, %arg1 : i32
    %c0_i32 = arith.constant 0 : i32
    %c0_i32_0 = arith.constant 0 : i32
    return %c0_i32, %1 : i32, i32
  }
  func.func @transform_2(%arg0: i32, %arg1: i32) -> (i32, i32, i32) {
    %c0_i32 = arith.constant 0 : i32
    %c0_i32_0 = arith.constant 0 : i32
    %c0_i32_1 = arith.constant 0 : i32
    return %arg0, %c0_i32, %c0_i32_0 : i32, i32, i32
  }
}

</mosaic_0001>

<llo_original>
// kernel: tpu_custom_call.1
$region0: #{tpu_custom_call.1}
  #allocation0 [shape = 'u32[]', space=smem, size = 0x4, offset = 0x4, fixed_abs, tag = 'smem constant byte address 0x4 - core index']
  #allocation1 [shape = 'u32[144,128]{1,0:T(1,128)}', space=vmem, size = 0x12000, scoped, tag = 'internal scratch']
  #allocation2 [shape = 'f32[1,128]{1,0:T(1,128)}', space=vmem, size = 0x200, scoped, tag = 'scratch operand']
  %s0 = inlined_call_operand.hbm [shape: f32[10,128], index: 0, kind: input, shape index: {}]
  %s1 = inlined_call_operand.vmem [shape: s32[1,128], index: 1, kind: input, shape index: {}]
  %s2 = inlined_call_operand.hbm [shape: f32[1,1,1], index: 2, kind: output, shape index: {}]
  %s3 = sld [smem:[#allocation0]]
  $region30: #{tpu_custom_call.1} parent=0
    _
  %s5 = ssub.s32 1, %s3
  %s6 = scalar_select 0, %s5, %s3
  $region1: #{tpu_custom_call.1} parent=0
    #allocation3 [shape = 'u8[8192]{0}', space=vmem, size = 0x2000, scoped, tag = 'input window, operand 0, single buffered']
    #allocation4 [shape = 's32[1]{0}', space=sflag, size = 0x4, scoped, tag = 'scoped memory for tpu_custom_call.1']
    #allocation5 [shape = 's32[1]{0}', space=sflag, size = 0x4, scoped, tag = 'scoped memory for tpu_custom_call.1']
    #allocation6 [shape = 'u8[512]{0}', space=vmem, size = 0x400, scoped, tag = 'output window, operand 0, single buffered']
    %7 = vsyncpa [#allocation4], 0
    %8 = vsyncpa [#allocation5], 0
    // Predicated region
    $region2: #{tpu_custom_call.1} parent=1 // pred_check
      _
    $region3: #{tpu_custom_call.1} parent=1 // pred_check_branch
      %10 = sbr.rel (0) target = $region5
    $region4: #{tpu_custom_call.1} parent=1 // pred_region
      %s11 = sadd.s32 0, 0
      %s13 = ssub.s32 256, 256
      %14 = vsyncadd [#allocation4], %s13
      %s15 = smul.addr %s11, 128
      %s16 = scalar_lea.hbm %s0, %s15
      %s17 = sshll.u32 [#allocation3], 4
      %s18 = int_to_ptr.vmem [resolvable:$true] %s17
      %23 = dma.hbm_to_vmem [thread:$0]  %s16, 256, %s18, [#allocation4], 128, 128, 8
    $region5: #{tpu_custom_call.1} parent=1 // pred_fallthru
      _
    // Predicated region
    $region6: #{tpu_custom_call.1} parent=1 // pred_check
      _
    $region7: #{tpu_custom_call.1} parent=1 // pred_check_branch
      %25 = sbr.rel (0) target = $region9
    $region8: #{tpu_custom_call.1} parent=1 // pred_region
      %s26 = sadd.s32 0, 0
      %p27 = scmp.lt.s32.totalorder %s26, 0
      %s28 = scalar_select %p27, %s26, 0
      %s29 = scalar_lea.vmem %s1, %s28
      %s30 = sadd.s32 0, 0
    $region9: #{tpu_custom_call.1} parent=1 // pred_fallthru
      _
    // Predicated region
    $region10: #{tpu_custom_call.1} parent=1 // pred_check
      _
    $region11: #{tpu_custom_call.1} parent=1 // pred_check_branch
      %32 = sbr.rel (0) target = $region13
    $region12: #{tpu_custom_call.1} parent=1 // pred_region
      %33 = dma.done [#allocation4], 256
    $region13: #{tpu_custom_call.1} parent=1 // pred_fallthru
      _
    %s34 = sadd.s32 0, 0
    %p35 = scmp.lt.s32.totalorder %s34, 0
    %s36 = scalar_select %p35, %s34, 0
    %s37 = scalar_lea.vmem %s1, %s36
    %s38 = sadd.s32 0, 0
    %s39 = sadd.s32 0, 0
    %p40 = scmp.lt.s32.totalorder %s39, 0
    %s41 = scalar_select %p40, %s39, 0
    %s42 = scalar_lea.vmem %s1, %s41
    %s43 = sadd.s32 0, 0
    %p44 = scmp.eq.s32.totalorder 0, 0
    // Predicated region
    $region14: #{tpu_custom_call.1} parent=1 // pred_check
      %p45 = pneg %p44
    $region15: #{tpu_custom_call.1} parent=1 // pred_check_branch
      %47 = sbr.rel (%p45) target = $region17
    $region16: #{tpu_custom_call.1} parent=1 // pred_region
      %48 = vst [vmem:[#allocation2] sm:$0x1] 0.0
    $region17: #{tpu_custom_call.1} parent=1 // pred_fallthru
      _
    %v49 = vld [vmem:[#allocation3] sm:$0xff]
    %v50 = vld [vmem:[#allocation3 + $0x8] sm:$0x3]
    %v51 = vld [vmem:[%s42] sm:$0x1]
    %vm52 = vcmask 1041408
    %v53 = vsel %vm52, %v50, -inf
    %v54 = vmax.f32 %v49, %v53
    %v55 = vrot.slane %v54, 4
    %v56 = vmax.f32 %v54, %v55
    %v57 = vrot.slane %v56, 2
    %v58 = vmax.f32 %v56, %v57
    %v59 = vrot.slane %v58, 1
    %v60 = vmax.f32 %v58, %v59
    %v61 = vsub.f32 %v49, %v60
    %v62 = vsub.f32 %v50, %v60
    %v63 = vmul.f32 %v61, 1.442695
    %v64 = vpow.pop %v63
    %v65 = vmul.f32 %v62, 1.442695
    %v66 = vpow.pop %v65
    %v67 = vsel %vm52, %v66, 0.0
    %v68 = vadd.f32 %v64, %v67
    %v69 = vrot.slane %v68, 4
    %v70 = vadd.f32 %v68, %v69
    %v71 = vrot.slane %v70, 2
    %v72 = vadd.f32 %v70, %v71
    %v73 = vrot.slane %v72, 1
    %v74 = vadd.f32 %v72, %v73
    %v75 = vlog2.pop %v74
    %v76 = vmul.f32 %v75, 0.6931472
    %v77 = vadd.f32 %v76, %v60
    %v78 = vlaneseq
    %v79 = vshrl.u32 %v78, 7
    %v80 = vadd.s32 %v79, 8
    %v81 = vlaneseq
    %v82 = vshrl.u32 %v81, 7
    %v83 = vsub.s32 0, %v82
    %v84 = vrot.slane %v51, %v83
    %vm85 = vcmp.eq.s32.totalorder %v79, %v84
    %vm86 = vcmp.eq.s32.totalorder %v80, %v84
    %v87 = vsel %vm85, %v49, 0.0
    %v88 = vsel %vm86, %v50, 0.0
    %v89 = vsel %vm52, %v88, 0.0
    %v90 = vadd.f32 %v87, %v89
    %v91 = vrot.slane %v90, 4
    %v92 = vadd.f32 %v90, %v91
    %v93 = vrot.slane %v92, 2
    %v94 = vadd.f32 %v92, %v93
    %v95 = vrot.slane %v94, 1
    %v96 = vadd.f32 %v94, %v95
    %v97 = vsub.f32 %v77, %v96
    %v98 = vsub.f32 0.0, %v97
    %v99 = vmul.f32 %v98, 1.442695
    %v100 = vpow.pop %v99
    %v101 = vsub.f32 1.0, %v100
    %v102 = vmul.f32 %v101, %v101
    %v103 = vmul.f32 %v102, %v97
    %s104 = sadd.s32 0, 0
    %s105 = smul.u32 %s104, 128
    %v106 = vlaneseq
    %v107 = vand.u32 %v106, 127
    %v108 = vstv %s105
    %v109 = vadd.s32 %v108, %v107
    %vm110 = vcmp.lt.s32.totalorder %v109, 100
    %v111 = vsel %vm110, %v103, 0.0
    %v112 = vld [vmem:[#allocation2] sm:$0x1]
    %v113 = vadd.f32 %v112, %v111
    %114 = vst [vmem:[#allocation2] sm:$0x1] %v113
    // Predicated region
    $region18: #{tpu_custom_call.1} parent=1 // pred_check
      %p115 = pneg %p44
    $region19: #{tpu_custom_call.1} parent=1 // pred_check_branch
      %117 = sbr.rel (%p115) target = $region21
    $region20: #{tpu_custom_call.1} parent=1 // pred_region
      %v118 = vld [vmem:[#allocation2] sm:$0x1]
      %vm119 = vcmask 1040384
      %v120 = vsel %vm119, %v118, 0.0
      %121 = vadd.xlane.f32.xlu0 %v120
      %v122 = vpop.xlane.xlu0 %121
      %v123 = vrot.slane %v122, 4
      %v124 = vadd.f32 %v122, %v123
      %v125 = vrot.slane %v124, 2
      %v126 = vadd.f32 %v124, %v125
      %v127 = vrot.slane %v126, 1
      %v128 = vadd.f32 %v126, %v127
      %s129 = vtos %v128
      %v130 = vstv %s129
      %vm131 = vcmask 0
      %132 = vst.msk [vmem:[#allocation6] sm:$0x1] %vm131, %v130
    $region21: #{tpu_custom_call.1} parent=1 // pred_fallthru
      _
    // Predicated region
    $region22: #{tpu_custom_call.1} parent=1 // pred_check
      _
    $region23: #{tpu_custom_call.1} parent=1 // pred_check_branch
      %134 = sbr.rel (0) target = $region25
    $region24: #{tpu_custom_call.1} parent=1 // pred_region
      %s136 = ssub.s32 16, 16
      %137 = vsyncadd [#allocation5], %s136
      %s139 = sshll.u32 [#allocation6], 4
      %s140 = int_to_ptr.vmem [resolvable:$true] %s139
      %142 = dma.vmem_to_hbm [thread:$0]  %s140, 16, %s2, [#allocation5]
    $region25: #{tpu_custom_call.1} parent=1 // pred_fallthru
      _
    // Predicated region
    $region26: #{tpu_custom_call.1} parent=1 // pred_check
      _
    $region27: #{tpu_custom_call.1} parent=1 // pred_check_branch
      %144 = sbr.rel (0) target = $region29
    $region28: #{tpu_custom_call.1} parent=1 // pred_region
      %145 = dma.done [#allocation5], 16
    $region29: #{tpu_custom_call.1} parent=1 // pred_fallthru
      _
    %146 = vsyncpa [#allocation4], 1
    %147 = vsyncpa [#allocation5], 1

</llo_original>
